<compile_context>
chip_gen: v7x
topology: tpu7x:2x2x1
jax: 0.10.0
libtpu: 0.0.40
codegen_flags: <defaults>
</compile_context>

<pallas_src>
import functools

import jax
import jax.numpy as jnp
from jax.experimental import pallas as pl
from jax.experimental.pallas import tpu as pltpu


def _round_up(x, m):
    return ((x + m - 1) // m) * m


def _cdiv(a, b):
    return -(-a // b)


def _device_kind():
    try:
        return jax.devices()[0].device_kind.lower()
    except Exception:
        return ""


def _vmem_capacity_bytes(is_v7):
    fallback = (64 << 20) if is_v7 else (128 << 20)
    try:
        info = pltpu.get_tpu_info()
        return int(getattr(info, "vmem_capacity_bytes", fallback))
    except Exception:
        return fallback


def _sublane(itemsize):
    return {1: 32, 2: 16}.get(itemsize, 8)


def _est_vmem_bytes(tm, th, n_h, d_pad, xb, wb):
    """Double-buffered x/out/weight tiles + biases (+ f32 acc when reducing)."""
    e = 2 * tm * d_pad * xb            # x tiles
    e += 2 * tm * d_pad * xb           # out tiles
    e += 2 * (d_pad * 2 * th) * wb     # fused [W_proj | W_gate] tiles
    e += 2 * (th * d_pad) * wb         # W_out tiles
    e += 2 * (2 * th + d_pad) * 4      # biases (f32)
    if n_h > 1:
        e += tm * d_pad * 4            # f32 accumulator scratch
    return e


def plan_gated_ffn(d_model, hidden, x_dtype, w_dtype, *, tm=None, th=None):
    """Pick (tm, th, padding, vmem limit) for the current TPU generation."""
    xb = jnp.dtype(x_dtype).itemsize
    wb = jnp.dtype(w_dtype).itemsize
    d_pad = _round_up(d_model, 128)
    h_min = _round_up(hidden, 128)

    kind = _device_kind()
    is_v7 = ("v7" in kind) or ("7x" in kind)
    is_v6 = "v6" in kind
    vmem_cap = _vmem_capacity_bytes(is_v7)
    budget = vmem_cap - (8 << 20)

    sub = _sublane(xb)
    if tm is None:
        # roofline targets (weight streaming): v6e ~650 FLOP/B, v7x ~310, v5e ~240
        tm = 1024 if is_v6 else (512 if is_v7 else 256)
    tm = max(sub, _round_up(int(tm), sub))

    if th is None:
        if _est_vmem_bytes(tm, h_min, 1, d_pad, xb, wb) <= budget:
            th = h_min                               # fast path: weights fully resident
        else:
            th = min(512, h_min)
            # shrink th before tm: acc RMW cost is negligible vs losing MXU feed
            while th > 128 and _est_vmem_bytes(tm, th, 2, d_pad, xb, wb) > budget:
                th = max(128, _round_up(th // 2, 128))
            while tm > 256 and _est_vmem_bytes(tm, th, 2, d_pad, xb, wb) > budget:
                tm = max(sub, _round_up(tm // 2, sub))
    th = min(_round_up(int(th), 128), h_min)
    h_pad = _round_up(h_min, th)
    n_h = h_pad // th

    est = _est_vmem_bytes(tm, th, n_h, d_pad, xb, wb)
    vmem_limit = max(int(est * 1.3) + (4 << 20), 32 << 20)
    vmem_limit = min(vmem_limit, vmem_cap - (4 << 20))   # respects v7x 64 MiB

    return dict(d_model=d_model, hidden=hidden, d_pad=d_pad, h_pad=h_pad,
                tm=tm, th=th, vmem_limit=vmem_limit, two_cores=is_v7)


def prepare_gated_ffn_params(w_proj, b_proj, w_gate, b_gate, w_out, b_out,
                             *, x_dtype=None, tm=None, th=None):
    """Pad + fuse the weights ONCE (call at parameter init, not per forward).

    w_proj/w_gate: [D, H], w_out: [H, D], biases [H]/[D].
    """
    d_model, hidden = w_proj.shape
    x_dtype = w_proj.dtype if x_dtype is None else x_dtype
    plan = plan_gated_ffn(d_model, hidden, x_dtype, w_proj.dtype, tm=tm, th=th)
    d_pad, h_pad, thp = plan["d_pad"], plan["h_pad"], plan["th"]
    n_h = h_pad // thp

    def pad_to(a, shape):
        if tuple(a.shape) == tuple(shape):
            return a
        return jnp.pad(a, [(0, s - d) for d, s in zip(a.shape, shape)])

    wp = pad_to(w_proj, (d_pad, h_pad))
    wg = pad_to(w_gate, (d_pad, h_pad))
    wo = pad_to(w_out, (h_pad, d_pad))
    bp = pad_to(b_proj.astype(jnp.float32).reshape(1, -1), (1, h_pad))
    bg = pad_to(b_gate.astype(jnp.float32).reshape(1, -1), (1, h_pad))
    bo = pad_to(b_out.astype(jnp.float32).reshape(1, -1), (1, d_pad))

    # Interleave per hidden tile: block h = [W_proj[:, h*th:(h+1)*th] | W_gate[...]]
    # -> the fused up-projection is a single MXU dot / single weight DMA per tile.
    wpg = jnp.stack([wp.reshape(d_pad, n_h, thp),
                     wg.reshape(d_pad, n_h, thp)], axis=2).reshape(d_pad, 2 * h_pad)
    bpg = jnp.stack([bp.reshape(n_h, thp),
                     bg.reshape(n_h, thp)], axis=1).reshape(1, 2 * h_pad)

    plan = dict(plan)
    plan.update(wpg=wpg, bpg=bpg, wo=wo, bo=bo)
    return plan


def _gated_ffn_kernel_resident(x_ref, wpg_ref, bpg_ref, wo_ref, bo_ref, o_ref):
    """Single hidden step; weight blocks stay resident in VMEM across token tiles."""
    th = wpg_ref.shape[1] // 2
    x = x_ref[...]                                             # (tm, D_pad) input dtype
    pg = jnp.dot(x, wpg_ref[...], preferred_element_type=jnp.float32) + bpg_ref[...]
    proj, gate = pg[:, :th], pg[:, th:]
    gate = gate * jax.lax.logistic(gate)                       # SiLU in f32 (EUP)
    h = (proj * gate).astype(x_ref.dtype)                      # bf16 for 2nd GEMM
    o_ref[...] = (jnp.dot(h, wo_ref[...], preferred_element_type=jnp.float32)
                  + bo_ref[...]).astype(o_ref.dtype)


def _gated_ffn_kernel_tiled(x_ref, wpg_ref, bpg_ref, wo_ref, bo_ref, o_ref, acc_ref):
    """Hidden axis tiled (grid axis 1, 'arbitrary'); f32 VMEM accumulator."""
    h_idx = pl.program_id(1)
    th = wpg_ref.shape[1] // 2

    @pl.when(h_idx == 0)
    def _():
        acc_ref[...] = jnp.zeros_like(acc_ref)

    x = x_ref[...]
    pg = jnp.dot(x, wpg_ref[...], preferred_element_type=jnp.float32) + bpg_ref[...]
    proj, gate = pg[:, :th], pg[:, th:]
    gate = gate * jax.lax.logistic(gate)
    h = (proj * gate).astype(x_ref.dtype)
    acc_ref[...] += jnp.dot(h, wo_ref[...], preferred_element_type=jnp.float32)

    @pl.when(h_idx == pl.num_programs(1) - 1)
    def _():
        o_ref[...] = (acc_ref[...] + bo_ref[...]).astype(o_ref.dtype)


@functools.partial(jax.jit, static_argnames=("tm", "th", "vmem_limit"))
def _gated_ffn_call(xp, wpg, bpg, wo, bo, *, tm, th, vmem_limit):
    m_pad, d_pad = xp.shape
    h_pad = wpg.shape[1] // 2
    n_h = h_pad // th
    grid = (m_pad // tm, n_h)

    in_specs = [
        pl.BlockSpec((tm, d_pad), lambda i, h: (i, 0)),        # x tile
        pl.BlockSpec((d_pad, 2 * th), lambda i, h: (0, h)),    # fused [W_proj|W_gate]
        pl.BlockSpec((1, 2 * th), lambda i, h: (0, h)),        # fused [b_proj|b_gate]
        pl.BlockSpec((th, d_pad), lambda i, h: (h, 0)),        # W_out tile
        pl.BlockSpec((1, d_pad), lambda i, h: (0, 0)),         # b_out (resident)
    ]
    out_spec = pl.BlockSpec((tm, d_pad), lambda i, h: (i, 0))

    if n_h == 1:
        # Constant weight index_maps -> weights load once, stay resident; no acc.
        kernel, scratch = _gated_ffn_kernel_resident, []
    else:
        kernel, scratch = _gated_ffn_kernel_tiled, [pltpu.VMEM((tm, d_pad), jnp.float32)]

    return pl.pallas_call(
        kernel,
        out_shape=jax.ShapeDtypeStruct((m_pad, d_pad), xp.dtype),
        grid_spec=pltpu.PrefetchScalarGridSpec(
            num_scalar_prefetch=0,
            grid=grid,
            in_specs=in_specs,
            out_specs=out_spec,
            scratch_shapes=scratch,
        ),
        compiler_params=pltpu.CompilerParams(
            dimension_semantics=("parallel", "arbitrary"),
            vmem_limit_bytes=vmem_limit,
        ),
    )(xp, wpg, bpg, wo, bo)


def gated_feed_forward(x, params):
    """x: [..., d_model]; params from prepare_gated_ffn_params()."""
    orig_shape = x.shape
    d_model, d_pad = params["d_model"], params["d_pad"]
    x2 = x.reshape(-1, d_model)
    m = x2.shape[0]

    sub = _sublane(jnp.dtype(x2.dtype).itemsize)
    tm = max(sub, min(_round_up(int(params["tm"]), sub), _round_up(m, sub)))
    # v7x has 2 TensorCores: keep >= 2 token tiles so the "parallel" axis shards.
    if params.get("two_cores", False) and m > sub and _cdiv(m, tm) < 2:
        tm = max(sub, _round_up(_cdiv(m, 2), sub))
    m_pad = _round_up(m, tm)

    if m_pad == m and d_pad == d_model:
        xp = x2
    else:
        xp = jnp.pad(x2, ((0, m_pad - m), (0, d_pad - d_model)))

    out = _gated_ffn_call(xp, params["wpg"], params["bpg"], params["wo"], params["bo"],
                          tm=tm, th=int(params["th"]),
                          vmem_limit=int(params["vmem_limit"]))
    return out[:m, :d_model].reshape(orig_shape)


def _reference(x, w_proj, b_proj, w_gate, b_gate, w_out, b_out):
    xf = x.astype(jnp.float32)
    proj = xf @ w_proj.astype(jnp.float32) + b_proj.astype(jnp.float32)
    g = xf @ w_gate.astype(jnp.float32) + b_gate.astype(jnp.float32)
    gate = g * jax.nn.sigmoid(g)
    return (proj * gate) @ w_out.astype(jnp.float32) + b_out.astype(jnp.float32)


if __name__ == "__main__":
    # Small shapes; seq=13 makes M=26 ragged, hidden=192 pads to 256 so the
    # explicitly-tiled run below takes 2 hidden steps with th=128.
    batch, seq, d_model, hidden = 2, 13, 32, 192
    dtype = jnp.bfloat16

    key = jax.random.PRNGKey(0)
    kx, kp, kbp, kg, kbg, ko, kbo = jax.random.split(key, 7)

    def lin_init(kw, kb, fan_in, fan_out):
        bound = 1.0 / (fan_in ** 0.5)
        w = jax.random.uniform(kw, (fan_in, fan_out), jnp.float32, -bound, bound)
        b = jax.random.uniform(kb, (fan_out,), jnp.float32, -bound, bound)
        return w.astype(dtype), b.astype(jnp.float32)

    x = jax.random.normal(kx, (batch, seq, d_model), jnp.float32).astype(dtype)
    w_proj, b_proj = lin_init(kp, kbp, d_model, hidden)
    w_gate, b_gate = lin_init(kg, kbg, d_model, hidden)
    w_out, b_out = lin_init(ko, kbo, hidden, d_model)

    ref = _reference(x.reshape(-1, d_model), w_proj, b_proj, w_gate, b_gate,
                     w_out, b_out).reshape(batch, seq, d_model)

    # 1) Auto plan: at these tiny shapes the weights fit VMEM -> resident fast
    #    path (single hidden step, no accumulator scratch).
    params = prepare_gated_ffn_params(w_proj, b_proj, w_gate, b_gate,
                                      w_out, b_out, x_dtype=dtype)
    out = jax.block_until_ready(gated_feed_forward(x, params))
    assert out.shape == (batch, seq, d_model)
    err = float(jnp.max(jnp.abs(out.astype(jnp.float32) - ref)))
    assert err < 3e-2, err   # bf16 MXU operands + bf16 intermediate h

    # 2) Small explicit tiles purely to exercise the hidden-reduction
    #    (accumulator) path: 2 token tiles x 2 hidden tiles.
    params_tiled = prepare_gated_ffn_params(w_proj, b_proj, w_gate, b_gate,
                                            w_out, b_out, x_dtype=dtype,
                                            tm=16, th=128)
    out2 = jax.block_until_ready(gated_feed_forward(x, params_tiled))
    err2 = float(jnp.max(jnp.abs(out2.astype(jnp.float32) - ref)))
    assert err2 < 3e-2, err2

    print("KERNEL_OK")
</pallas_src>

<mosaic_0001>
module attributes {stable_mosaic.version = 11 : i64} {
  func.func @_gated_ffn_kernel_resident(%arg0: i32, %arg1: i32, %arg2: memref<32x128xbf16, #tpu.memory_space<vmem>>, %arg3: memref<128x512xbf16, #tpu.memory_space<vmem>>, %arg4: memref<1x512xf32, #tpu.memory_space<vmem>>, %arg5: memref<256x128xbf16, #tpu.memory_space<vmem>>, %arg6: memref<1x128xf32, #tpu.memory_space<vmem>>, %arg7: memref<32x128xbf16, #tpu.memory_space<vmem>>) attributes {dimension_semantics = [#tpu.dimension_semantics<parallel>, #tpu.dimension_semantics<arbitrary>], iteration_bounds = array<i64: 1, 1>, scalar_prefetch = 0 : i64, scratch_operands = 0 : i64, tpu.core_type = #tpu.core_type<tc>, window_params = [{transform_indices = @transform_0, window_bounds = array<i64: 32, 128>}, {transform_indices = @transform_1, window_bounds = array<i64: 128, 512>}, {transform_indices = @transform_2, window_bounds = array<i64: 1, 512>}, {transform_indices = @transform_3, window_bounds = array<i64: 256, 128>}, {pipeline_mode = #tpu.pipeline_mode<synchronous>, transform_indices = @transform_4, window_bounds = array<i64: 1, 128>}, {transform_indices = @transform_5, window_bounds = array<i64: 32, 128>}]} {
    %c0 = arith.constant 0 : index
    %c0_0 = arith.constant 0 : index
    %0 = vector.load %arg2[%c0, %c0_0] : memref<32x128xbf16, #tpu.memory_space<vmem>>, vector<32x128xbf16>
    %c0_1 = arith.constant 0 : index
    %c0_2 = arith.constant 0 : index
    %1 = vector.load %arg3[%c0_1, %c0_2] : memref<128x512xbf16, #tpu.memory_space<vmem>>, vector<128x512xbf16>
    %cst = arith.constant dense<0.000000e+00> : vector<32x512xf32>
    %2 = tpu.matmul %0, %1, %cst {dimension_numbers = #tpu.dot_dimension_numbers<[1], [0], [0], [1], [0, 0, 1, 1], [], []>} : vector<32x128xbf16>, vector<128x512xbf16>, vector<32x512xf32> -> vector<32x512xf32>
    %c0_3 = arith.constant 0 : index
    %c0_4 = arith.constant 0 : index
    %3 = vector.load %arg4[%c0_3, %c0_4] : memref<1x512xf32, #tpu.memory_space<vmem>>, vector<1x512xf32>
    %4 = vector.broadcast %3 : vector<1x512xf32> to vector<32x512xf32>
    %5 = arith.addf %2, %4 : vector<32x512xf32>
    %6 = vector.extract_strided_slice %5 {offsets = [0, 0], sizes = [32, 256], strides = [1, 1]} : vector<32x512xf32> to vector<32x256xf32>
    %7 = vector.extract_strided_slice %5 {offsets = [0, 256], sizes = [32, 256], strides = [1, 1]} : vector<32x512xf32> to vector<32x256xf32>
    %8 = arith.negf %7 : vector<32x256xf32>
    %9 = math.exp %8 : vector<32x256xf32>
    %cst_5 = arith.constant 1.000000e+00 : f32
    %10 = vector.broadcast %cst_5 : f32 to vector<32x256xf32>
    %11 = arith.addf %10, %9 : vector<32x256xf32>
    %12 = arith.divf %10, %11 : vector<32x256xf32>
    %13 = arith.mulf %7, %12 : vector<32x256xf32>
    %14 = arith.mulf %6, %13 : vector<32x256xf32>
    %15 = arith.truncf %14 : vector<32x256xf32> to vector<32x256xbf16>
    %c0_6 = arith.constant 0 : index
    %c0_7 = arith.constant 0 : index
    %16 = vector.load %arg5[%c0_6, %c0_7] : memref<256x128xbf16, #tpu.memory_space<vmem>>, vector<256x128xbf16>
    %cst_8 = arith.constant dense<0.000000e+00> : vector<32x128xf32>
    %17 = tpu.matmul %15, %16, %cst_8 {dimension_numbers = #tpu.dot_dimension_numbers<[1], [0], [0], [1], [0, 0, 1, 1], [], []>} : vector<32x256xbf16>, vector<256x128xbf16>, vector<32x128xf32> -> vector<32x128xf32>
    %c0_9 = arith.constant 0 : index
    %c0_10 = arith.constant 0 : index
    %18 = vector.load %arg6[%c0_9, %c0_10] : memref<1x128xf32, #tpu.memory_space<vmem>>, vector<1x128xf32>
    %19 = vector.broadcast %18 : vector<1x128xf32> to vector<32x128xf32>
    %20 = arith.addf %17, %19 : vector<32x128xf32>
    %21 = arith.truncf %20 : vector<32x128xf32> to vector<32x128xbf16>
    %c0_11 = arith.constant 0 : index
    %c0_12 = arith.constant 0 : index
    %22 = vector.load %arg7[%c0_11, %c0_12] : memref<32x128xbf16, #tpu.memory_space<vmem>>, vector<32x128xbf16>
    tpu.vector_store %arg7[%c0_11, %c0_12], %21 {strides = array<i32>} : memref<32x128xbf16, #tpu.memory_space<vmem>>, vector<32x128xbf16>,
    return
  }
  func.func @transform_0(%arg0: i32, %arg1: i32) -> (i32, i32) {
    %c0_i32 = arith.constant 0 : i32
    %c0_i32_0 = arith.constant 0 : i32
    return %arg0, %c0_i32 : i32, i32
  }
  func.func @transform_1(%arg0: i32, %arg1: i32) -> (i32, i32) {
    %c0_i32 = arith.constant 0 : i32
    %c0_i32_0 = arith.constant 0 : i32
    return %c0_i32, %arg1 : i32, i32
  }
  func.func @transform_2(%arg0: i32, %arg1: i32) -> (i32, i32) {
    %c0_i32 = arith.constant 0 : i32
    %c0_i32_0 = arith.constant 0 : i32
    return %c0_i32, %arg1 : i32, i32
  }
  func.func @transform_3(%arg0: i32, %arg1: i32) -> (i32, i32) {
    %c0_i32 = arith.constant 0 : i32
    %c0_i32_0 = arith.constant 0 : i32
    return %arg1, %c0_i32 : i32, i32
  }
  func.func @transform_4(%arg0: i32, %arg1: i32) -> (i32, i32) {
    %c0_i32 = arith.constant 0 : i32
    %c0_i32_0 = arith.constant 0 : i32
    %c0_i32_1 = arith.constant 0 : i32
    return %c0_i32, %c0_i32_0 : i32, i32
  }
  func.func @transform_5(%arg0: i32, %arg1: i32) -> (i32, i32) {
    %c0_i32 = arith.constant 0 : i32
    %c0_i32_0 = arith.constant 0 : i32
    return %arg0, %c0_i32 : i32, i32
  }
}

</mosaic_0001>

<llo_original>
// kernel: _gated_ffn_call.1
$region0: #{_gated_ffn_call.1}
  #allocation0 [shape = 'u32[]', space=smem, size = 0x4, offset = 0x4, fixed_abs, tag = 'smem constant byte address 0x4 - core index']
  #allocation1 [shape = 'u32[144,128]{1,0:T(1,128)}', space=vmem, size = 0x12000, scoped, tag = 'internal scratch']
  %s0 = inlined_call_operand.hbm [shape: bf16[32,128], index: 0, kind: input, shape index: {}]
  %s1 = inlined_call_operand.hbm [shape: bf16[128,512], index: 1, kind: input, shape index: {}]
  %s2 = inlined_call_operand.vmem [shape: f32[1,512], index: 2, kind: input, shape index: {}]
  %s3 = inlined_call_operand.hbm [shape: bf16[256,128], index: 3, kind: input, shape index: {}]
  %s4 = inlined_call_operand.vmem [shape: f32[1,128], index: 4, kind: input, shape index: {}]
  %s5 = inlined_call_operand.hbm [shape: bf16[32,128], index: 5, kind: output, shape index: {}]
  %s6 = sld [smem:[#allocation0]]
  $region42: #{_gated_ffn_call.1} parent=0
    _
  %s8 = ssub.s32 1, %s6
  %s9 = scalar_select 0, %s8, %s6
  $region1: #{_gated_ffn_call.1} parent=0
    #allocation2 [shape = 'u8[8192]{0}', space=vmem, size = 0x2000, scoped, tag = 'input window, operand 0, single buffered']
    #allocation3 [shape = 's32[1]{0}', space=sflag, size = 0x4, scoped, tag = 'scoped memory for _gated_ffn_call.1']
    #allocation4 [shape = 's32[1]{0}', space=sflag, size = 0x4, scoped, tag = 'scoped memory for _gated_ffn_call.1']
    #allocation5 [shape = 'u8[131072]{0}', space=vmem, size = 0x20000, scoped, tag = 'input window, operand 1, single buffered']
    #allocation6 [shape = 's32[1]{0}', space=sflag, size = 0x4, scoped, tag = 'scoped memory for _gated_ffn_call.1']
    #allocation7 [shape = 'u8[65536]{0}', space=vmem, size = 0x10000, scoped, tag = 'input window, operand 3, single buffered']
    #allocation8 [shape = 'u8[8192]{0}', space=vmem, size = 0x2000, scoped, tag = 'output window, operand 0, single buffered']
    %10 = vsyncpa [#allocation3], 0
    %11 = vsyncpa [#allocation6], 0
    %12 = vsyncpa [#allocation4], 0
    // Predicated region
    $region2: #{_gated_ffn_call.1} parent=1 // pred_check
      _
    $region3: #{_gated_ffn_call.1} parent=1 // pred_check_branch
      %14 = sbr.rel (0) target = $region5
    $region4: #{_gated_ffn_call.1} parent=1 // pred_region
      %s16 = ssub.s32 256, 256
      %17 = vsyncadd [#allocation3], %s16
      %s18 = sshll.u32 [#allocation2], 4
      %s19 = int_to_ptr.vmem [resolvable:$true] %s18
      %24 = dma.hbm_to_vmem [thread:$0]  %s0, 256, %s19, [#allocation3], 64, 64, 4
    $region5: #{_gated_ffn_call.1} parent=1 // pred_fallthru
      _
    // Predicated region
    $region6: #{_gated_ffn_call.1} parent=1 // pred_check
      _
    $region7: #{_gated_ffn_call.1} parent=1 // pred_check_branch
      %26 = sbr.rel (0) target = $region9
    $region8: #{_gated_ffn_call.1} parent=1 // pred_region
      %s28 = ssub.s32 4096, 4096
      %29 = vsyncadd [#allocation6], %s28
      %s30 = sshll.u32 [#allocation5], 4
      %s31 = int_to_ptr.vmem [resolvable:$true] %s30
      %36 = dma.hbm_to_vmem [thread:$0]  %s1, 4096, %s31, [#allocation6], 256, 256, 16
    $region9: #{_gated_ffn_call.1} parent=1 // pred_fallthru
      _
    // Predicated region
    $region10: #{_gated_ffn_call.1} parent=1 // pred_check
      _
    $region11: #{_gated_ffn_call.1} parent=1 // pred_check_branch
      %38 = sbr.rel (0) target = $region13
    $region12: #{_gated_ffn_call.1} parent=1 // pred_region
      _
    $region13: #{_gated_ffn_call.1} parent=1 // pred_fallthru
      _
    // Predicated region
    $region14: #{_gated_ffn_call.1} parent=1 // pred_check
      _
    $region15: #{_gated_ffn_call.1} parent=1 // pred_check_branch
      %40 = sbr.rel (0) target = $region17
    $region16: #{_gated_ffn_call.1} parent=1 // pred_region
      %s42 = ssub.s32 2048, 2048
      %43 = vsyncadd [#allocation6], %s42
      %s44 = sshll.u32 [#allocation7], 4
      %s45 = int_to_ptr.vmem [resolvable:$true] %s44
      %50 = dma.hbm_to_vmem [thread:$0]  %s3, 2048, %s45, [#allocation6], 64, 64, 4
    $region17: #{_gated_ffn_call.1} parent=1 // pred_fallthru
      _
    // Predicated region
    $region18: #{_gated_ffn_call.1} parent=1 // pred_check
      _
    $region19: #{_gated_ffn_call.1} parent=1 // pred_check_branch
      %52 = sbr.rel (0) target = $region21
    $region20: #{_gated_ffn_call.1} parent=1 // pred_region
      _
    $region21: #{_gated_ffn_call.1} parent=1 // pred_fallthru
      _
    // Predicated region
    $region22: #{_gated_ffn_call.1} parent=1 // pred_check
      _
    $region23: #{_gated_ffn_call.1} parent=1 // pred_check_branch
      %54 = sbr.rel (0) target = $region25
    $region24: #{_gated_ffn_call.1} parent=1 // pred_region
      %55 = dma.done [#allocation3], 256
    $region25: #{_gated_ffn_call.1} parent=1 // pred_fallthru
      _
    // Predicated region
    $region26: #{_gated_ffn_call.1} parent=1 // pred_check
      _
    $region27: #{_gated_ffn_call.1} parent=1 // pred_check_branch
      %57 = sbr.rel (0) target = $region29
    $region28: #{_gated_ffn_call.1} parent=1 // pred_region
      %58 = dma.done [#allocation6], 4096
    $region29: #{_gated_ffn_call.1} parent=1 // pred_fallthru
      _
    // Predicated region
    $region30: #{_gated_ffn_call.1} parent=1 // pred_check
      _
    $region31: #{_gated_ffn_call.1} parent=1 // pred_check_branch
      %60 = sbr.rel (0) target = $region33
    $region32: #{_gated_ffn_call.1} parent=1 // pred_region
      %61 = dma.done [#allocation6], 2048
    $region33: #{_gated_ffn_call.1} parent=1 // pred_fallthru
      _
    %v63 = vld [vmem:[#allocation2] sm:$0xf]
    %v64 = vld [vmem:[#allocation2 + $0x4] sm:$0xf]
    %v65 = vld [vmem:[#allocation2 + $0x8] sm:$0xf]
    %v66 = vld [vmem:[#allocation2 + $0xc] sm:$0xf]
    %v67 = vld [vmem:[#allocation5] sm:$0xff]
    %v68 = vld [vmem:[#allocation5 + $0x8] sm:$0xff]
    %v69 = vld [vmem:[#allocation5 + $0x10] sm:$0xff]
    %v70 = vld [vmem:[#allocation5 + $0x18] sm:$0xff]
    %v71 = vld [vmem:[#allocation5 + $0x20] sm:$0xff]
    %v72 = vld [vmem:[#allocation5 + $0x28] sm:$0xff]
    %v73 = vld [vmem:[#allocation5 + $0x30] sm:$0xff]
    %v74 = vld [vmem:[#allocation5 + $0x38] sm:$0xff]
    %v75 = vld [vmem:[#allocation5 + $0x40] sm:$0xff]
    %v76 = vld [vmem:[#allocation5 + $0x48] sm:$0xff]
    %v77 = vld [vmem:[#allocation5 + $0x50] sm:$0xff]
    %v78 = vld [vmem:[#allocation5 + $0x58] sm:$0xff]
    %v79 = vld [vmem:[#allocation5 + $0x60] sm:$0xff]
    %v80 = vld [vmem:[#allocation5 + $0x68] sm:$0xff]
    %v81 = vld [vmem:[#allocation5 + $0x70] sm:$0xff]
    %v82 = vld [vmem:[#allocation5 + $0x78] sm:$0xff]
    %v83 = vld [vmem:[#allocation5 + $0x80] sm:$0xff]
    %v84 = vld [vmem:[#allocation5 + $0x88] sm:$0xff]
    %v85 = vld [vmem:[#allocation5 + $0x90] sm:$0xff]
    %v86 = vld [vmem:[#allocation5 + $0x98] sm:$0xff]
    %v87 = vld [vmem:[#allocation5 + $0xa0] sm:$0xff]
    %v88 = vld [vmem:[#allocation5 + $0xa8] sm:$0xff]
    %v89 = vld [vmem:[#allocation5 + $0xb0] sm:$0xff]
    %v90 = vld [vmem:[#allocation5 + $0xb8] sm:$0xff]
    %v91 = vld [vmem:[#allocation5 + $0xc0] sm:$0xff]
    %v92 = vld [vmem:[#allocation5 + $0xc8] sm:$0xff]
    %v93 = vld [vmem:[#allocation5 + $0xd0] sm:$0xff]
    %v94 = vld [vmem:[#allocation5 + $0xd8] sm:$0xff]
    %v95 = vld [vmem:[#allocation5 + $0xe0] sm:$0xff]
    %v96 = vld [vmem:[#allocation5 + $0xe8] sm:$0xff]
    %v97 = vld [vmem:[#allocation5 + $0xf0] sm:$0xff]
    %v98 = vld [vmem:[#allocation5 + $0xf8] sm:$0xff]
    %v99 = vld [vmem:[%s2] sm:$0xf]
    %v101 = vlaneseq
    %v102 = vshrl.u32 %v101, 7
    %v103 = vsub.s32 0, %v102
    %v104 = vrot.slane %v99, %v103
    %v105 = vlaneseq
    %v106 = vshrl.u32 %v105, 7
    %v107 = vsub.s32 1, %v106
    %v108 = vrot.slane %v99, %v107
    %v109 = vlaneseq
    %v110 = vshrl.u32 %v109, 7
    %v111 = vsub.s32 2, %v110
    %v112 = vrot.slane %v99, %v111
    %v113 = vlaneseq
    %v114 = vshrl.u32 %v113, 7
    %v115 = vsub.s32 3, %v114
    %v116 = vrot.slane %v99, %v115
    %v125 = vunpack.c.l.b16 %v63
    %v126 = vunpack.c.l.b16 %v64
    %v127 = vunpack.c.l.b16 %v65
    %v128 = vunpack.c.l.b16 %v66
    %v129 = vpack.c.b16 %v126, %v125
    %v130 = vpack.c.b16 %v128, %v127
    %v165 = vunpack.c.l.b16 %v67
    %v166 = vunpack.c.h.b16 %v67
    %v167 = vunpack.c.l.b16 %v68
    %v168 = vunpack.c.h.b16 %v68
    %v169 = vunpack.c.l.b16 %v69
    %v170 = vunpack.c.h.b16 %v69
    %v171 = vunpack.c.l.b16 %v70
    %v172 = vunpack.c.h.b16 %v70
    %v173 = vunpack.c.l.b16 %v71
    %v174 = vunpack.c.h.b16 %v71
    %v175 = vunpack.c.l.b16 %v72
    %v176 = vunpack.c.h.b16 %v72
    %v177 = vunpack.c.l.b16 %v73
    %v178 = vunpack.c.h.b16 %v73
    %v179 = vunpack.c.l.b16 %v74
    %v180 = vunpack.c.h.b16 %v74
    %v181 = vunpack.c.l.b16 %v75
    %v182 = vunpack.c.h.b16 %v75
    %v183 = vunpack.c.l.b16 %v76
    %v184 = vunpack.c.h.b16 %v76
    %v185 = vunpack.c.l.b16 %v77
    %v186 = vunpack.c.h.b16 %v77
    %v187 = vunpack.c.l.b16 %v78
    %v188 = vunpack.c.h.b16 %v78
    %v189 = vunpack.c.l.b16 %v79
    %v190 = vunpack.c.h.b16 %v79
    %v191 = vunpack.c.l.b16 %v80
    %v192 = vunpack.c.h.b16 %v80
    %v193 = vunpack.c.l.b16 %v81
    %v194 = vunpack.c.h.b16 %v81
    %v195 = vunpack.c.l.b16 %v82
    %v196 = vunpack.c.h.b16 %v82
    %v197 = vunpack.c.l.b16 %v83
    %v198 = vunpack.c.h.b16 %v83
    %v199 = vunpack.c.l.b16 %v84
    %v200 = vunpack.c.h.b16 %v84
    %v201 = vunpack.c.l.b16 %v85
    %v202 = vunpack.c.h.b16 %v85
    %v203 = vunpack.c.l.b16 %v86
    %v204 = vunpack.c.h.b16 %v86
    %v205 = vunpack.c.l.b16 %v87
    %v206 = vunpack.c.h.b16 %v87
    %v207 = vunpack.c.l.b16 %v88
    %v208 = vunpack.c.h.b16 %v88
    %v209 = vunpack.c.l.b16 %v89
    %v210 = vunpack.c.h.b16 %v89
    %v211 = vunpack.c.l.b16 %v90
    %v212 = vunpack.c.h.b16 %v90
    %v213 = vunpack.c.l.b16 %v91
    %v214 = vunpack.c.h.b16 %v91
    %v215 = vunpack.c.l.b16 %v92
    %v216 = vunpack.c.h.b16 %v92
    %v217 = vunpack.c.l.b16 %v93
    %v218 = vunpack.c.h.b16 %v93
    %v219 = vunpack.c.l.b16 %v94
    %v220 = vunpack.c.h.b16 %v94
    %v221 = vunpack.c.l.b16 %v95
    %v222 = vunpack.c.h.b16 %v95
    %v223 = vunpack.c.l.b16 %v96
    %v224 = vunpack.c.h.b16 %v96
    %v225 = vunpack.c.l.b16 %v97
    %v226 = vunpack.c.h.b16 %v97
    %v227 = vunpack.c.l.b16 %v98
    %v228 = vunpack.c.h.b16 %v98
    %v229 = vpack.c.b16 %v169, %v165
    %v230 = vpack.c.b16 %v170, %v166
    %v231 = vpack.c.b16 %v171, %v167
    %v232 = vpack.c.b16 %v172, %v168
    %v233 = vpack.c.b16 %v177, %v173
    %v234 = vpack.c.b16 %v178, %v174
    %v235 = vpack.c.b16 %v179, %v175
    %v236 = vpack.c.b16 %v180, %v176
    %v237 = vpack.c.b16 %v185, %v181
    %v238 = vpack.c.b16 %v186, %v182
    %v239 = vpack.c.b16 %v187, %v183
    %v240 = vpack.c.b16 %v188, %v184
    %v241 = vpack.c.b16 %v193, %v189
    %v242 = vpack.c.b16 %v194, %v190
    %v243 = vpack.c.b16 %v195, %v191
    %v244 = vpack.c.b16 %v196, %v192
    %v245 = vpack.c.b16 %v201, %v197
    %v246 = vpack.c.b16 %v202, %v198
    %v247 = vpack.c.b16 %v203, %v199
    %v248 = vpack.c.b16 %v204, %v200
    %v249 = vpack.c.b16 %v209, %v205
    %v250 = vpack.c.b16 %v210, %v206
    %v251 = vpack.c.b16 %v211, %v207
    %v252 = vpack.c.b16 %v212, %v208
    %v253 = vpack.c.b16 %v217, %v213
    %v254 = vpack.c.b16 %v218, %v214
    %v255 = vpack.c.b16 %v219, %v215
    %v256 = vpack.c.b16 %v220, %v216
    %v257 = vpack.c.b16 %v225, %v221
    %v258 = vpack.c.b16 %v226, %v222
    %v259 = vpack.c.b16 %v227, %v223
    %v260 = vpack.c.b16 %v228, %v224
    %293 = vmatprep.subr.bf16.mxu0 %v230
    %294 = vmatpush1.bf16.msra.mxu0 %v229
    %295 = vmatprep.subr.bf16.mxu0 %v234
    %296 = vmatpush1.bf16.msra.mxu0 %v233
    %297 = vmatprep.subr.bf16.mxu0 %v238
    %298 = vmatpush1.bf16.msra.mxu0 %v237
    %299 = vmatprep.subr.bf16.mxu0 %v242
    %300 = vmatpush1.bf16.msra.mxu0 %v241
    %301 = vmatprep.subr.bf16.mxu0 %v246
    %302 = vmatpush1.bf16.msra.mxu0 %v245
    %303 = vmatprep.subr.bf16.mxu0 %v250
    %304 = vmatpush1.bf16.msra.mxu0 %v249
    %305 = vmatprep.subr.bf16.mxu0 %v254
    %306 = vmatpush1.bf16.msra.mxu0 %v253
    %307 = vmatprep.subr.bf16.mxu0 %v258
    %308 = vmatpush1.bf16.msra.mxu0 %v257
    %309 = vmatprep.subr.bf16.mxu0 0
    %310 = vmatpush1.bf16.msra.mxu0 0
    %311 = vmatprep.subr.bf16.mxu0 0
    %312 = vmatpush1.bf16.msra.mxu0 0
    %313 = vmatprep.subr.bf16.mxu0 0
    %314 = vmatpush1.bf16.msra.mxu0 0
    %315 = vmatprep.subr.bf16.mxu0 0
    %316 = vmatpush1.bf16.msra.mxu0 0
    %317 = vmatprep.subr.bf16.mxu0 0
    %318 = vmatpush1.bf16.msra.mxu0 0
    %319 = vmatprep.subr.bf16.mxu0 0
    %320 = vmatpush1.bf16.msra.mxu0 0
    %321 = vmatprep.subr.bf16.mxu0 0
    %322 = vmatpush1.bf16.msra.mxu0 0
    %323 = vmatprep.subr.bf16.mxu0 0
    %324 = vmatpush1.bf16.msra.mxu0 0
    %325 = vmatprep.mubr.bf16.mxu0 0
    %326 = vmatmul.mubr.bf16.gmra.mrb[0].mxu0 %v129
    %v327 = vpop.f32.mrb[0].mxu0
    %v328 = vadd.f32 %v104, %v327
    %v329 = vpop.f32.mrb[0].mxu0
    %v330 = vadd.f32 %v108, %v329
    %v331 = vpop.f32.mrb[0].mxu0
    %v332 = vadd.f32 %v104, %v331
    %v333 = vpop.f32.mrb[0].mxu0
    %v334 = vadd.f32 %v108, %v333
    %335 = vmatprep.mubr.bf16.mxu0 0
    %336 = vmatmul.mubr.bf16.gmra.mrb[0].mxu0 %v130
    %v337 = vpop.f32.mrb[0].mxu0
    %v338 = vadd.f32 %v104, %v337
    %v339 = vpop.f32.mrb[0].mxu0
    %v340 = vadd.f32 %v108, %v339
    %v341 = vpop.f32.mrb[0].mxu0
    %v342 = vadd.f32 %v104, %v341
    %v343 = vpop.f32.mrb[0].mxu0
    %v344 = vadd.f32 %v108, %v343
    %345 = vdwg.mxu0
    %346 = vmatprep.subr.bf16.mxu0 %v232
    %347 = vmatpush1.bf16.msra.mxu0 %v231
    %348 = vmatprep.subr.bf16.mxu0 %v236
    %349 = vmatpush1.bf16.msra.mxu0 %v235
    %350 = vmatprep.subr.bf16.mxu0 %v240
    %351 = vmatpush1.bf16.msra.mxu0 %v239
    %352 = vmatprep.subr.bf16.mxu0 %v244
    %353 = vmatpush1.bf16.msra.mxu0 %v243
    %354 = vmatprep.subr.bf16.mxu0 %v248
    %355 = vmatpush1.bf16.msra.mxu0 %v247
    %356 = vmatprep.subr.bf16.mxu0 %v252
    %357 = vmatpush1.bf16.msra.mxu0 %v251
    %358 = vmatprep.subr.bf16.mxu0 %v256
    %359 = vmatpush1.bf16.msra.mxu0 %v255
    %360 = vmatprep.subr.bf16.mxu0 %v260
    %361 = vmatpush1.bf16.msra.mxu0 %v259
    %362 = vmatprep.subr.bf16.mxu0 0
    %363 = vmatpush1.bf16.msra.mxu0 0
    %364 = vmatprep.subr.bf16.mxu0 0
    %365 = vmatpush1.bf16.msra.mxu0 0
    %366 = vmatprep.subr.bf16.mxu0 0
    %367 = vmatpush1.bf16.msra.mxu0 0
    %368 = vmatprep.subr.bf16.mxu0 0
    %369 = vmatpush1.bf16.msra.mxu0 0
    %370 = vmatprep.subr.bf16.mxu0 0
    %371 = vmatpush1.bf16.msra.mxu0 0
    %372 = vmatprep.subr.bf16.mxu0 0
    %373 = vmatpush1.bf16.msra.mxu0 0
    %374 = vmatprep.subr.bf16.mxu0 0
    %375 = vmatpush1.bf16.msra.mxu0 0
    %376 = vmatprep.subr.bf16.mxu0 0
    %377 = vmatpush1.bf16.msra.mxu0 0
    %378 = vmatprep.mubr.bf16.mxu0 0
    %379 = vmatmul.mubr.bf16.gmra.mrb[0].mxu0 %v129
    %v380 = vpop.f32.mrb[0].mxu0
    %v381 = vadd.f32 %v112, %v380
    %v382 = vpop.f32.mrb[0].mxu0
    %v383 = vadd.f32 %v116, %v382
    %v384 = vpop.f32.mrb[0].mxu0
    %v385 = vadd.f32 %v112, %v384
    %v386 = vpop.f32.mrb[0].mxu0
    %v387 = vadd.f32 %v116, %v386
    %388 = vmatprep.mubr.bf16.mxu0 0
    %389 = vmatmul.mubr.bf16.gmra.mrb[0].mxu0 %v130
    %v390 = vpop.f32.mrb[0].mxu0
    %v391 = vadd.f32 %v112, %v390
    %v392 = vpop.f32.mrb[0].mxu0
    %v393 = vadd.f32 %v116, %v392
    %v394 = vpop.f32.mrb[0].mxu0
    %v395 = vadd.f32 %v112, %v394
    %v396 = vpop.f32.mrb[0].mxu0
    %v397 = vadd.f32 %v116, %v396
    %398 = vdwg.mxu0
    %v399 = vxor.u32 %v381, 2147483648
    %v400 = vxor.u32 %v383, 2147483648
    %v401 = vxor.u32 %v385, 2147483648
    %v402 = vxor.u32 %v387, 2147483648
    %v403 = vxor.u32 %v391, 2147483648
    %v404 = vxor.u32 %v393, 2147483648
    %v405 = vxor.u32 %v395, 2147483648
    %v406 = vxor.u32 %v397, 2147483648
    %v407 = vmul.f32 %v399, 1.442695
    %v408 = vpow.pop %v407
    %v409 = vmul.f32 %v400, 1.442695
    %v410 = vpow.pop %v409
    %v411 = vmul.f32 %v401, 1.442695
    %v412 = vpow.pop %v411
    %v413 = vmul.f32 %v402, 1.442695
    %v414 = vpow.pop %v413
    %v415 = vmul.f32 %v403, 1.442695
    %v416 = vpow.pop %v415
    %v417 = vmul.f32 %v404, 1.442695
    %v418 = vpow.pop %v417
    %v419 = vmul.f32 %v405, 1.442695
    %v420 = vpow.pop %v419
    %v421 = vmul.f32 %v406, 1.442695
    %v422 = vpow.pop %v421
    %v423 = vadd.f32 %v408, 1.0
    %v424 = vadd.f32 %v410, 1.0
    %v425 = vadd.f32 %v412, 1.0
    %v426 = vadd.f32 %v414, 1.0
    %v427 = vadd.f32 %v416, 1.0
    %v428 = vadd.f32 %v418, 1.0
    %v429 = vadd.f32 %v420, 1.0
    %v430 = vadd.f32 %v422, 1.0
    %v431 = vrcp.pop %v423
    %v432 = vmul.f32 1.0, %v431
    %v433 = vrcp.pop %v424
    %v434 = vmul.f32 1.0, %v433
    %v435 = vrcp.pop %v425
    %v436 = vmul.f32 1.0, %v435
    %v437 = vrcp.pop %v426
    %v438 = vmul.f32 1.0, %v437
    %v439 = vrcp.pop %v427
    %v440 = vmul.f32 1.0, %v439
    %v441 = vrcp.pop %v428
    %v442 = vmul.f32 1.0, %v441
    %v443 = vrcp.pop %v429
    %v444 = vmul.f32 1.0, %v443
    %v445 = vrcp.pop %v430
    %v446 = vmul.f32 1.0, %v445
    %v447 = vmul.f32 %v381, %v432
    %v448 = vmul.f32 %v383, %v434
    %v449 = vmul.f32 %v385, %v436
    %v450 = vmul.f32 %v387, %v438
    %v451 = vmul.f32 %v391, %v440
    %v452 = vmul.f32 %v393, %v442
    %v453 = vmul.f32 %v395, %v444
    %v454 = vmul.f32 %v397, %v446
    %v455 = vmul.f32 %v328, %v447
    %v456 = vmul.f32 %v330, %v448
    %v457 = vmul.f32 %v332, %v449
    %v458 = vmul.f32 %v334, %v450
    %v459 = vmul.f32 %v338, %v451
    %v460 = vmul.f32 %v340, %v452
    %v461 = vmul.f32 %v342, %v453
    %v462 = vmul.f32 %v344, %v454
    %v463 = vpack.c.bf16 %v457, %v455
    %v464 = vpack.c.bf16 %v458, %v456
    %v465 = vpack.c.bf16 %v461, %v459
    %v466 = vpack.c.bf16 %v462, %v460
    %v467 = vld [vmem:[#allocation7] sm:$0xf]
    %v468 = vld [vmem:[#allocation7 + $0x4] sm:$0xf]
    %v469 = vld [vmem:[#allocation7 + $0x8] sm:$0xf]
    %v470 = vld [vmem:[#allocation7 + $0xc] sm:$0xf]
    %v471 = vld [vmem:[#allocation7 + $0x10] sm:$0xf]
    %v472 = vld [vmem:[#allocation7 + $0x14] sm:$0xf]
    %v473 = vld [vmem:[#allocation7 + $0x18] sm:$0xf]
    %v474 = vld [vmem:[#allocation7 + $0x1c] sm:$0xf]
    %v475 = vld [vmem:[#allocation7 + $0x20] sm:$0xf]
    %v476 = vld [vmem:[#allocation7 + $0x24] sm:$0xf]
    %v477 = vld [vmem:[#allocation7 + $0x28] sm:$0xf]
    %v478 = vld [vmem:[#allocation7 + $0x2c] sm:$0xf]
    %v479 = vld [vmem:[#allocation7 + $0x30] sm:$0xf]
    %v480 = vld [vmem:[#allocation7 + $0x34] sm:$0xf]
    %v481 = vld [vmem:[#allocation7 + $0x38] sm:$0xf]
    %v482 = vld [vmem:[#allocation7 + $0x3c] sm:$0xf]
    %v483 = vld [vmem:[#allocation7 + $0x40] sm:$0xf]
    %v484 = vld [vmem:[#allocation7 + $0x44] sm:$0xf]
    %v485 = vld [vmem:[#allocation7 + $0x48] sm:$0xf]
    %v486 = vld [vmem:[#allocation7 + $0x4c] sm:$0xf]
    %v487 = vld [vmem:[#allocation7 + $0x50] sm:$0xf]
    %v488 = vld [vmem:[#allocation7 + $0x54] sm:$0xf]
    %v489 = vld [vmem:[#allocation7 + $0x58] sm:$0xf]
    %v490 = vld [vmem:[#allocation7 + $0x5c] sm:$0xf]
    %v491 = vld [vmem:[#allocation7 + $0x60] sm:$0xf]
    %v492 = vld [vmem:[#allocation7 + $0x64] sm:$0xf]
    %v493 = vld [vmem:[#allocation7 + $0x68] sm:$0xf]
    %v494 = vld [vmem:[#allocation7 + $0x6c] sm:$0xf]
    %v495 = vld [vmem:[#allocation7 + $0x70] sm:$0xf]
    %v496 = vld [vmem:[#allocation7 + $0x74] sm:$0xf]
    %v497 = vld [vmem:[#allocation7 + $0x78] sm:$0xf]
    %v498 = vld [vmem:[#allocation7 + $0x7c] sm:$0xf]
    %v499 = vld [vmem:[%s4] sm:$0x1]
    %v501 = vlaneseq
    %v502 = vshrl.u32 %v501, 7
    %v503 = vsub.s32 0, %v502
    %v504 = vrot.slane %v499, %v503
    %v538 = vunpack.c.l.b16 %v467
    %v539 = vunpack.c.l.b16 %v468
    %v540 = vunpack.c.l.b16 %v469
    %v541 = vunpack.c.l.b16 %v470
    %v542 = vunpack.c.l.b16 %v471
    %v543 = vunpack.c.l.b16 %v472
    %v544 = vunpack.c.l.b16 %v473
    %v545 = vunpack.c.l.b16 %v474
    %v546 = vunpack.c.l.b16 %v475
    %v547 = vunpack.c.l.b16 %v476
    %v548 = vunpack.c.l.b16 %v477
    %v549 = vunpack.c.l.b16 %v478
    %v550 = vunpack.c.l.b16 %v479
    %v551 = vunpack.c.l.b16 %v480
    %v552 = vunpack.c.l.b16 %v481
    %v553 = vunpack.c.l.b16 %v482
    %v554 = vunpack.c.l.b16 %v483
    %v555 = vunpack.c.l.b16 %v484
    %v556 = vunpack.c.l.b16 %v485
    %v557 = vunpack.c.l.b16 %v486
    %v558 = vunpack.c.l.b16 %v487
    %v559 = vunpack.c.l.b16 %v488
    %v560 = vunpack.c.l.b16 %v489
    %v561 = vunpack.c.l.b16 %v490
    %v562 = vunpack.c.l.b16 %v491
    %v563 = vunpack.c.l.b16 %v492
    %v564 = vunpack.c.l.b16 %v493
    %v565 = vunpack.c.l.b16 %v494
    %v566 = vunpack.c.l.b16 %v495
    %v567 = vunpack.c.l.b16 %v496
    %v568 = vunpack.c.l.b16 %v497
    %v569 = vunpack.c.l.b16 %v498
    %v570 = vpack.c.b16 %v539, %v538
    %v571 = vpack.c.b16 %v541, %v540
    %v572 = vpack.c.b16 %v543, %v542
    %v573 = vpack.c.b16 %v545, %v544
    %v574 = vpack.c.b16 %v547, %v546
    %v575 = vpack.c.b16 %v549, %v548
    %v576 = vpack.c.b16 %v551, %v550
    %v577 = vpack.c.b16 %v553, %v552
    %v578 = vpack.c.b16 %v555, %v554
    %v579 = vpack.c.b16 %v557, %v556
    %v580 = vpack.c.b16 %v559, %v558
    %v581 = vpack.c.b16 %v561, %v560
    %v582 = vpack.c.b16 %v563, %v562
    %v583 = vpack.c.b16 %v565, %v564
    %v584 = vpack.c.b16 %v567, %v566
    %v585 = vpack.c.b16 %v569, %v568
    %602 = vmatprep.subr.bf16.mxu0 0
    %603 = vmatpush1.bf16.msra.mxu0 %v570
    %604 = vmatprep.subr.bf16.mxu0 0
    %605 = vmatpush1.bf16.msra.mxu0 %v571
    %606 = vmatprep.subr.bf16.mxu0 0
    %607 = vmatpush1.bf16.msra.mxu0 %v572
    %608 = vmatprep.subr.bf16.mxu0 0
    %609 = vmatpush1.bf16.msra.mxu0 %v573
    %610 = vmatprep.subr.bf16.mxu0 0
    %611 = vmatpush1.bf16.msra.mxu0 %v574
    %612 = vmatprep.subr.bf16.mxu0 0
    %613 = vmatpush1.bf16.msra.mxu0 %v575
    %614 = vmatprep.subr.bf16.mxu0 0
    %615 = vmatpush1.bf16.msra.mxu0 %v576
    %616 = vmatprep.subr.bf16.mxu0 0
    %617 = vmatpush1.bf16.msra.mxu0 %v577
    %618 = vmatprep.subr.bf16.mxu0 0
    %619 = vmatpush1.bf16.msra.mxu0 %v578
    %620 = vmatprep.subr.bf16.mxu0 0
    %621 = vmatpush1.bf16.msra.mxu0 %v579
    %622 = vmatprep.subr.bf16.mxu0 0
    %623 = vmatpush1.bf16.msra.mxu0 %v580
    %624 = vmatprep.subr.bf16.mxu0 0
    %625 = vmatpush1.bf16.msra.mxu0 %v581
    %626 = vmatprep.subr.bf16.mxu0 0
    %627 = vmatpush1.bf16.msra.mxu0 %v582
    %628 = vmatprep.subr.bf16.mxu0 0
    %629 = vmatpush1.bf16.msra.mxu0 %v583
    %630 = vmatprep.subr.bf16.mxu0 0
    %631 = vmatpush1.bf16.msra.mxu0 %v584
    %632 = vmatprep.subr.bf16.mxu0 0
    %633 = vmatpush1.bf16.msra.mxu0 %v585
    %634 = vmatprep.mubr.bf16.mxu0 %v464
    %635 = vmatmul.mubr.bf16.gmra.mrb[0].mxu0 %v463
    %v636 = vpop.f32.mrb[0].mxu0
    %v637 = vadd.f32 %v504, %v636
    %v638 = vpop.f32.mrb[0].mxu0
    %v639 = vpop.f32.mrb[0].mxu0
    %v640 = vadd.f32 %v504, %v639
    %v641 = vpop.f32.mrb[0].mxu0
    %642 = vmatprep.mubr.bf16.mxu0 %v466
    %643 = vmatmul.mubr.bf16.gmra.mrb[0].mxu0 %v465
    %v644 = vpop.f32.mrb[0].mxu0
    %v645 = vadd.f32 %v504, %v644
    %v646 = vpop.f32.mrb[0].mxu0
    %v647 = vpop.f32.mrb[0].mxu0
    %v648 = vadd.f32 %v504, %v647
    %v649 = vpop.f32.mrb[0].mxu0
    %650 = vdwg.mxu0
    %v651 = vpack.c.bf16 %v640, %v637
    %v652 = vpack.c.bf16 %v648, %v645
    %v655 = vunpack.c.l.b16 %v651
    %v656 = vunpack.c.h.b16 %v651
    %v657 = vunpack.c.l.b16 %v652
    %v658 = vunpack.c.h.b16 %v652
    %v659 = vpack.c.b16 %v655, %v655
    %v660 = vpack.c.b16 %v656, %v656
    %v661 = vpack.c.b16 %v657, %v657
    %v662 = vpack.c.b16 %v658, %v658
    %667 = vst [vmem:[#allocation8] sm:$0xf] %v659
    %668 = vst [vmem:[#allocation8 + $0x4] sm:$0xf] %v660
    %669 = vst [vmem:[#allocation8 + $0x8] sm:$0xf] %v661
    %670 = vst [vmem:[#allocation8 + $0xc] sm:$0xf] %v662
    // Predicated region
    $region34: #{_gated_ffn_call.1} parent=1 // pred_check
      _
    $region35: #{_gated_ffn_call.1} parent=1 // pred_check_branch
      %672 = sbr.rel (0) target = $region37
    $region36: #{_gated_ffn_call.1} parent=1 // pred_region
      %s674 = ssub.s32 256, 256
      %675 = vsyncadd [#allocation4], %s674
      %s676 = sshll.u32 [#allocation8], 4
      %s677 = int_to_ptr.vmem [resolvable:$true] %s676
      %682 = dma.vmem_to_hbm [thread:$0]  %s677, 256, %s5, [#allocation4], 64, 64, 4
    $region37: #{_gated_ffn_call.1} parent=1 // pred_fallthru
      _
    // Predicated region
    $region38: #{_gated_ffn_call.1} parent=1 // pred_check
      _
    $region39: #{_gated_ffn_call.1} parent=1 // pred_check_branch
      %684 = sbr.rel (0) target = $region41
    $region40: #{_gated_ffn_call.1} parent=1 // pred_region
      %685 = dma.done [#allocation4], 256
    $region41: #{_gated_ffn_call.1} parent=1 // pred_fallthru
      _
    %686 = vsyncpa [#allocation3], 1
    %687 = vsyncpa [#allocation6], 1
    %688 = vsyncpa [#allocation4], 1

</llo_original>
